<compile_context>
chip_gen: v5e
topology: v5e:2x2
jax: 0.10.0
libtpu: 0.0.40
codegen_flags: <defaults>
</compile_context>

<pallas_src>
import jax
import jax.numpy as jnp
from jax.experimental import pallas as pl
from jax.experimental.pallas import tpu as pltpu

LEAKY_SLOPE = 0.2
_LANE = 128
_SUBLANE = 8


def _leaky_relu(x):
    # one vmul + vmax (correct for slope < 1)
    return jnp.maximum(x, LEAKY_SLOPE * x)


def _round_up(n, m):
    return ((n + m - 1) // m) * m


def _vmem_capacity_bytes():
    """Per-core VMEM capacity; conservative fallback (v7x: 64 MiB) if the query fails."""
    try:
        info = pltpu.get_tpu_info()
        cap = getattr(info, "vmem_capacity_bytes", None)
        if cap:
            return int(cap)
    except Exception:
        pass
    return 64 * 1024 * 1024


def _vmem_bytes(tb, in_size, h1, h2, act_itemsize):
    """(8,128)-padding-aware VMEM estimate: double-buffered x/out streams + resident params."""
    in_p = _round_up(in_size, _LANE)
    h1_p = _round_up(h1, _LANE)
    h2_p = _round_up(h2, _LANE)
    x_buf = tb * in_p * 4                                   # streamed f32 x tile (lane padded)
    o_buf = _SUBLANE * tb * 4                               # (1, tb) f32 out tile (sublane padded)
    w_res = (_round_up(in_size, 16) * h1_p                  # w0 (resident, single buffer)
             + _round_up(h1, 16) * h2_p                     # w1
             + 16 * h2_p) * act_itemsize                    # w2 row
    b_res = (_SUBLANE * h1_p + _SUBLANE * h2_p + _SUBLANE * _LANE) * 4
    live = tb * (in_p * act_itemsize + (h1_p + h2_p) * (4 + act_itemsize))  # casts + f32 h
    return 2 * x_buf + 2 * o_buf + w_res + b_res + live


def disc_kernel(x_ref, w0_ref, b0_ref, w1_ref, b1_ref, w2_ref, b2_ref, o_ref):
    """One batch tile: o[0, :] = MLP(x_tile)[:, 0], laid out lane-major."""
    mxu_dtype = w0_ref.dtype
    # In-kernel cast (VPU, effectively free) instead of a separate XLA pass over x in HBM.
    x = x_ref[...].astype(mxu_dtype)

    # Layer 0: Linear(in, h1) + LeakyReLU  (bf16 MXU operands, f32 accumulation)
    h = jnp.dot(x, w0_ref[...], preferred_element_type=jnp.float32)
    h = _leaky_relu(h + b0_ref[...])

    # Layer 1: Linear(h1, h2) + LeakyReLU
    h = jnp.dot(h.astype(mxu_dtype), w1_ref[...], preferred_element_type=jnp.float32)
    h = _leaky_relu(h + b1_ref[...])

    # Final Linear(h2, 1) computed as (1, h2) @ (tb, h2)^T so the tb per-row scores land
    # lane-major -> one dense (1, tb) store instead of tb/8 masked single-lane stores.
    scores = jax.lax.dot_general(
        w2_ref[...], h.astype(w2_ref.dtype),
        dimension_numbers=(((1,), (1,)), ((), ())),
        preferred_element_type=jnp.float32)
    o_ref[...] = scores + b2_ref[...]


def gan_discriminator(x, params, *, batch_tile=2048, use_bf16=True):
    """x: (B, in_size) float32. params: dict from init_params. Returns (B, 1) float32."""
    B, in_size = x.shape
    h1 = params["w0"].shape[1]
    h2 = params["w1"].shape[1]

    mxu_dtype = jnp.bfloat16 if use_bf16 else jnp.float32
    act_itemsize = jnp.dtype(mxu_dtype).itemsize

    # Parameters are tiny and cast once; x streams straight from HBM in f32 (no extra HBM pass).
    w0 = params["w0"].astype(mxu_dtype)
    w1 = params["w1"].astype(mxu_dtype)
    w2_row = params["w2"].reshape(1, h2).astype(mxu_dtype)
    b0 = params["b0"].reshape(1, h1).astype(jnp.float32)
    b1 = params["b1"].reshape(1, h2).astype(jnp.float32)
    b2 = params["b2"].reshape(1, 1).astype(jnp.float32)

    # Batch tile: lane-aligned (the output row is (1, tb)), large to amortize per-step overhead.
    tb = max(_LANE, (int(batch_tile) // _LANE) * _LANE)
    tb = min(tb, _round_up(B, _LANE))
    if pl.cdiv(B, tb) == 1 and B >= 2 * _LANE:
        # Give the second TensorCore (v7x megacore) its own tile when the batch is big enough.
        tb = _round_up(pl.cdiv(B, 2), _LANE)

    # VMEM budget: ~85% of the chip's capacity (~54 MiB on v7x, ~109 MiB on v5e/v6e).
    vmem_budget = int(0.85 * _vmem_capacity_bytes())
    while tb > _LANE and _vmem_bytes(tb, in_size, h1, h2, act_itemsize) > vmem_budget:
        tb = max(_LANE, _round_up(tb // 2, _LANE))

    n_tiles = int(pl.cdiv(B, tb))
    vmem_limit = int(min(vmem_budget,
                         max(16 * 1024 * 1024,
                             2 * _vmem_bytes(tb, in_size, h1, h2, act_itemsize))))

    def run(single_buffer_params):
        resident_kwargs = {"pipeline_mode": pl.Buffered(1)} if single_buffer_params else {}

        def resident(shape):
            # Constant index_map -> fetched once, stays in VMEM across all grid steps.
            return pl.BlockSpec(shape, lambda i, _n=len(shape): (0,) * _n, **resident_kwargs)

        return pl.pallas_call(
            disc_kernel,
            out_shape=jax.ShapeDtypeStruct((1, n_tiles * tb), jnp.float32),
            grid=(n_tiles,),
            in_specs=[
                pl.BlockSpec((tb, in_size), lambda i: (i, 0)),  # x: streamed + double-buffered
                resident((in_size, h1)),                        # w0
                resident((1, h1)),                              # b0
                resident((h1, h2)),                             # w1
                resident((1, h2)),                              # b1
                resident((1, h2)),                              # w2 (as a row)
                resident((1, 1)),                               # b2
            ],
            out_specs=pl.BlockSpec((1, tb), lambda i: (0, i)),  # lane-dense score row per tile
            compiler_params=pltpu.CompilerParams(
                dimension_semantics=("parallel",),  # batch tiles are independent (v7x: 2 TCs)
                vmem_limit_bytes=vmem_limit,
            ),
        )(x, w0, b0, w1, b1, w2_row, b2)

    try:
        out_row = run(single_buffer_params=True)
    except Exception:  # JAX without BlockSpec pipeline_mode / Buffered(1): default buffering
        out_row = run(single_buffer_params=False)

    # Rows past B in the ragged last tile are garbage but never mix with valid rows -> slice off.
    return out_row.reshape(-1)[:B].reshape(B, 1)


def init_params(key, in_size, hidden_size, num_layers=2, factor=1):
    """Init mirroring GAN_Discriminator(in_size, hidden_size, num_layers=2, factor=1):
      Linear(in_size, hidden) + LeakyReLU(0.2)
      Linear(hidden, hidden // 2) + LeakyReLU(0.2)
      Linear(hidden // 2, 1)
    """
    assert num_layers == 2 and factor == 1, "this script instantiates the 2-layer config"
    h1 = hidden_size
    h2 = hidden_size // 2
    ks = jax.random.split(key, 6)

    def lin(kw, kb, fan_in, fan_out):
        bound = 1.0 / jnp.sqrt(fan_in)
        w = jax.random.uniform(kw, (fan_in, fan_out), jnp.float32, -bound, bound)
        b = jax.random.uniform(kb, (1, fan_out), jnp.float32, -bound, bound)
        return w, b

    w0, b0 = lin(ks[0], ks[1], in_size, h1)
    w1, b1 = lin(ks[2], ks[3], h1, h2)
    w2, b2 = lin(ks[4], ks[5], h2, 1)
    return dict(w0=w0, b0=b0, w1=w1, b1=b1, w2=w2, b2=b2)


def reference_f32(x, p):
    """Pure-f32 reference (== PyTorch module forward)."""
    h = _leaky_relu(x @ p["w0"] + p["b0"])
    h = _leaky_relu(h @ p["w1"] + p["b1"])
    return h @ p["w2"] + p["b2"]


def reference_mixed(x, p):
    """Same dtype policy as the kernel: bf16 MXU operands, f32 accumulation/epilogue."""
    cd = jnp.bfloat16
    h = jnp.dot(x.astype(cd), p["w0"].astype(cd), preferred_element_type=jnp.float32) + p["b0"]
    h = _leaky_relu(h)
    h = jnp.dot(h.astype(cd), p["w1"].astype(cd), preferred_element_type=jnp.float32) + p["b1"]
    h = _leaky_relu(h)
    return jnp.dot(h.astype(cd), p["w2"].astype(cd), preferred_element_type=jnp.float32) + p["b2"]


if __name__ == "__main__":
    key = jax.random.PRNGKey(0)
    kx, kp, kx2 = jax.random.split(key, 3)

    in_size, hidden = 32, 32
    params = init_params(kp, in_size, hidden, num_layers=2, factor=1)

    # Small case (matches the toy shapes): single tile, ragged (B < 128) batch block.
    B = 8
    x = jax.random.normal(kx, (B, in_size), dtype=jnp.float32)
    out = jax.block_until_ready(gan_discriminator(x, params))
    assert out.shape == (B, 1)
    assert jnp.allclose(out, reference_mixed(x, params), atol=1e-3, rtol=1e-3), \
        "mismatch vs. mixed-precision reference"
    assert jnp.allclose(out, reference_f32(x, params), atol=5e-2, rtol=5e-2), \
        "mismatch vs. pure-f32 reference"

    # Multi-tile case exercising the batch grid + ragged last tile (200 = 128 + 72).
    B2 = 200
    x2 = jax.random.normal(kx2, (B2, in_size), dtype=jnp.float32)
    out2 = jax.block_until_ready(gan_discriminator(x2, params, batch_tile=128))
    assert out2.shape == (B2, 1)
    assert jnp.allclose(out2, reference_mixed(x2, params), atol=1e-3, rtol=1e-3), \
        "mismatch vs. mixed-precision reference (gridded case)"

    print("KERNEL_OK")
</pallas_src>

<mosaic_0001>
module attributes {stable_mosaic.version = 11 : i64} {
  func.func @disc_kernel(%arg0: i32, %arg1: memref<128x32xf32, #tpu.memory_space<vmem>>, %arg2: memref<32x32xbf16, #tpu.memory_space<vmem>>, %arg3: memref<1x32xf32, #tpu.memory_space<vmem>>, %arg4: memref<32x16xbf16, #tpu.memory_space<vmem>>, %arg5: memref<1x16xf32, #tpu.memory_space<vmem>>, %arg6: memref<1x16xbf16, #tpu.memory_space<vmem>>, %arg7: memref<1x1xf32, #tpu.memory_space<vmem>>, %arg8: memref<1x128xf32, #tpu.memory_space<vmem>>) attributes {dimension_semantics = [#tpu.dimension_semantics<parallel>], iteration_bounds = array<i64: 1>, scalar_prefetch = 0 : i64, scratch_operands = 0 : i64, tpu.core_type = #tpu.core_type<tc>, window_params = [{transform_indices = @transform_0, window_bounds = array<i64: 128, 32>}, {pipeline_mode = #tpu.pipeline_mode<synchronous>, transform_indices = @transform_1, window_bounds = array<i64: 32, 32>}, {pipeline_mode = #tpu.pipeline_mode<synchronous>, transform_indices = @transform_2, window_bounds = array<i64: 1, 32>}, {pipeline_mode = #tpu.pipeline_mode<synchronous>, transform_indices = @transform_3, window_bounds = array<i64: 32, 16>}, {pipeline_mode = #tpu.pipeline_mode<synchronous>, transform_indices = @transform_4, window_bounds = array<i64: 1, 16>}, {pipeline_mode = #tpu.pipeline_mode<synchronous>, transform_indices = @transform_5, window_bounds = array<i64: 1, 16>}, {pipeline_mode = #tpu.pipeline_mode<synchronous>, transform_indices = @transform_6, window_bounds = array<i64: 1, 1>}, {transform_indices = @transform_7, window_bounds = array<i64: 1, 128>}]} {
    %c0 = arith.constant 0 : index
    %c0_0 = arith.constant 0 : index
    %0 = vector.load %arg1[%c0, %c0_0] : memref<128x32xf32, #tpu.memory_space<vmem>>, vector<128x32xf32>
    %1 = arith.truncf %0 : vector<128x32xf32> to vector<128x32xbf16>
    %c0_1 = arith.constant 0 : index
    %c0_2 = arith.constant 0 : index
    %2 = vector.load %arg2[%c0_1, %c0_2] : memref<32x32xbf16, #tpu.memory_space<vmem>>, vector<32x32xbf16>
    %cst = arith.constant dense<0.000000e+00> : vector<128x32xf32>
    %3 = tpu.matmul %1, %2, %cst {dimension_numbers = #tpu.dot_dimension_numbers<[1], [0], [0], [1], [0, 0, 1, 1], [], []>} : vector<128x32xbf16>, vector<32x32xbf16>, vector<128x32xf32> -> vector<128x32xf32>
    %c0_3 = arith.constant 0 : index
    %c0_4 = arith.constant 0 : index
    %4 = vector.load %arg3[%c0_3, %c0_4] : memref<1x32xf32, #tpu.memory_space<vmem>>, vector<1x32xf32>
    %5 = vector.broadcast %4 : vector<1x32xf32> to vector<128x32xf32>
    %6 = arith.addf %3, %5 : vector<128x32xf32>
    %cst_5 = arith.constant 2.000000e-01 : f32
    %7 = vector.broadcast %cst_5 : f32 to vector<128x32xf32>
    %8 = arith.mulf %7, %6 : vector<128x32xf32>
    %9 = arith.maximumf %6, %8 : vector<128x32xf32>
    %10 = arith.truncf %9 : vector<128x32xf32> to vector<128x32xbf16>
    %c0_6 = arith.constant 0 : index
    %c0_7 = arith.constant 0 : index
    %11 = vector.load %arg4[%c0_6, %c0_7] : memref<32x16xbf16, #tpu.memory_space<vmem>>, vector<32x16xbf16>
    %cst_8 = arith.constant dense<0.000000e+00> : vector<128x16xf32>
    %12 = tpu.matmul %10, %11, %cst_8 {dimension_numbers = #tpu.dot_dimension_numbers<[1], [0], [0], [1], [0, 0, 1, 1], [], []>} : vector<128x32xbf16>, vector<32x16xbf16>, vector<128x16xf32> -> vector<128x16xf32>
    %c0_9 = arith.constant 0 : index
    %c0_10 = arith.constant 0 : index
    %13 = vector.load %arg5[%c0_9, %c0_10] : memref<1x16xf32, #tpu.memory_space<vmem>>, vector<1x16xf32>
    %14 = vector.broadcast %13 : vector<1x16xf32> to vector<128x16xf32>
    %15 = arith.addf %12, %14 : vector<128x16xf32>
    %cst_11 = arith.constant 2.000000e-01 : f32
    %16 = vector.broadcast %cst_11 : f32 to vector<128x16xf32>
    %17 = arith.mulf %16, %15 : vector<128x16xf32>
    %18 = arith.maximumf %15, %17 : vector<128x16xf32>
    %c0_12 = arith.constant 0 : index
    %c0_13 = arith.constant 0 : index
    %19 = vector.load %arg6[%c0_12, %c0_13] : memref<1x16xbf16, #tpu.memory_space<vmem>>, vector<1x16xbf16>
    %20 = arith.truncf %18 : vector<128x16xf32> to vector<128x16xbf16>
    %cst_14 = arith.constant dense<0.000000e+00> : vector<1x128xf32>
    %21 = tpu.matmul %19, %20, %cst_14 {dimension_numbers = #tpu.dot_dimension_numbers<[1], [1], [0], [0], [0, 0, 1, 0], [], []>} : vector<1x16xbf16>, vector<128x16xbf16>, vector<1x128xf32> -> vector<1x128xf32>
    %c0_15 = arith.constant 0 : index
    %c0_16 = arith.constant 0 : index
    %22 = vector.load %arg7[%c0_15, %c0_16] : memref<1x1xf32, #tpu.memory_space<vmem>>, vector<1x1xf32>
    %23 = vector.broadcast %22 : vector<1x1xf32> to vector<1x128xf32>
    %24 = arith.addf %21, %23 : vector<1x128xf32>
    %c0_17 = arith.constant 0 : index
    %c0_18 = arith.constant 0 : index
    %25 = vector.load %arg8[%c0_17, %c0_18] : memref<1x128xf32, #tpu.memory_space<vmem>>, vector<1x128xf32>
    tpu.vector_store %arg8[%c0_17, %c0_18], %24 {strides = array<i32>} : memref<1x128xf32, #tpu.memory_space<vmem>>, vector<1x128xf32>,
    return
  }
  func.func @transform_0(%arg0: i32) -> (i32, i32) {
    %c0_i32 = arith.constant 0 : i32
    %c0_i32_0 = arith.constant 0 : i32
    return %arg0, %c0_i32 : i32, i32
  }
  func.func @transform_1(%arg0: i32) -> (i32, i32) {
    %c0_i32 = arith.constant 0 : i32
    %c0_i32_0 = arith.constant 0 : i32
    %c0_i32_1 = arith.constant 0 : i32
    return %c0_i32, %c0_i32_0 : i32, i32
  }
  func.func @transform_2(%arg0: i32) -> (i32, i32) {
    %c0_i32 = arith.constant 0 : i32
    %c0_i32_0 = arith.constant 0 : i32
    %c0_i32_1 = arith.constant 0 : i32
    return %c0_i32, %c0_i32_0 : i32, i32
  }
  func.func @transform_3(%arg0: i32) -> (i32, i32) {
    %c0_i32 = arith.constant 0 : i32
    %c0_i32_0 = arith.constant 0 : i32
    %c0_i32_1 = arith.constant 0 : i32
    return %c0_i32, %c0_i32_0 : i32, i32
  }
  func.func @transform_4(%arg0: i32) -> (i32, i32) {
    %c0_i32 = arith.constant 0 : i32
    %c0_i32_0 = arith.constant 0 : i32
    %c0_i32_1 = arith.constant 0 : i32
    return %c0_i32, %c0_i32_0 : i32, i32
  }
  func.func @transform_5(%arg0: i32) -> (i32, i32) {
    %c0_i32 = arith.constant 0 : i32
    %c0_i32_0 = arith.constant 0 : i32
    %c0_i32_1 = arith.constant 0 : i32
    return %c0_i32, %c0_i32_0 : i32, i32
  }
  func.func @transform_6(%arg0: i32) -> (i32, i32) {
    %c0_i32 = arith.constant 0 : i32
    %c0_i32_0 = arith.constant 0 : i32
    %c0_i32_1 = arith.constant 0 : i32
    return %c0_i32, %c0_i32_0 : i32, i32
  }
  func.func @transform_7(%arg0: i32) -> (i32, i32) {
    %c0_i32 = arith.constant 0 : i32
    %c0_i32_0 = arith.constant 0 : i32
    return %c0_i32, %arg0 : i32, i32
  }
}

module attributes {stable_mosaic.version = 11 : i64} {
  func.func @disc_kernel(%arg0: i32, %arg1: memref<128x32xf32, #tpu.memory_space<vmem>>, %arg2: memref<32x32xbf16, #tpu.memory_space<vmem>>, %arg3: memref<1x32xf32, #tpu.memory_space<vmem>>, %arg4: memref<32x16xbf16, #tpu.memory_space<vmem>>, %arg5: memref<1x16xf32, #tpu.memory_space<vmem>>, %arg6: memref<1x16xbf16, #tpu.memory_space<vmem>>, %arg7: memref<1x1xf32, #tpu.memory_space<vmem>>, %arg8: memref<1x128xf32, #tpu.memory_space<vmem>>) attributes {dimension_semantics = [#tpu.dimension_semantics<parallel>], iteration_bounds = array<i64: 1>, scalar_prefetch = 0 : i64, scratch_operands = 0 : i64, tpu.core_type = #tpu.core_type<tc>, window_params = [{transform_indices = @transform_0, window_bounds = array<i64: 128, 32>}, {pipeline_mode = #tpu.pipeline_mode<synchronous>, transform_indices = @transform_1, window_bounds = array<i64: 32, 32>}, {pipeline_mode = #tpu.pipeline_mode<synchronous>, transform_indices = @transform_2, window_bounds = array<i64: 1, 32>}, {pipeline_mode = #tpu.pipeline_mode<synchronous>, transform_indices = @transform_3, window_bounds = array<i64: 32, 16>}, {pipeline_mode = #tpu.pipeline_mode<synchronous>, transform_indices = @transform_4, window_bounds = array<i64: 1, 16>}, {pipeline_mode = #tpu.pipeline_mode<synchronous>, transform_indices = @transform_5, window_bounds = array<i64: 1, 16>}, {pipeline_mode = #tpu.pipeline_mode<synchronous>, transform_indices = @transform_6, window_bounds = array<i64: 1, 1>}, {transform_indices = @transform_7, window_bounds = array<i64: 1, 128>}]} {
    %c0 = arith.constant 0 : index
    %c0_0 = arith.constant 0 : index
    %0 = vector.load %arg1[%c0, %c0_0] : memref<128x32xf32, #tpu.memory_space<vmem>>, vector<128x32xf32>
    %1 = arith.truncf %0 : vector<128x32xf32> to vector<128x32xbf16>
    %c0_1 = arith.constant 0 : index
    %c0_2 = arith.constant 0 : index
    %2 = vector.load %arg2[%c0_1, %c0_2] : memref<32x32xbf16, #tpu.memory_space<vmem>>, vector<32x32xbf16>
    %cst = arith.constant dense<0.000000e+00> : vector<128x32xf32>
    %3 = tpu.matmul %1, %2, %cst {dimension_numbers = #tpu.dot_dimension_numbers<[1], [0], [0], [1], [0, 0, 1, 1], [], []>} : vector<128x32xbf16>, vector<32x32xbf16>, vector<128x32xf32> -> vector<128x32xf32>
    %c0_3 = arith.constant 0 : index
    %c0_4 = arith.constant 0 : index
    %4 = vector.load %arg3[%c0_3, %c0_4] : memref<1x32xf32, #tpu.memory_space<vmem>>, vector<1x32xf32>
    %5 = vector.broadcast %4 : vector<1x32xf32> to vector<128x32xf32>
    %6 = arith.addf %3, %5 : vector<128x32xf32>
    %cst_5 = arith.constant 2.000000e-01 : f32
    %7 = vector.broadcast %cst_5 : f32 to vector<128x32xf32>
    %8 = arith.mulf %7, %6 : vector<128x32xf32>
    %9 = arith.maximumf %6, %8 : vector<128x32xf32>
    %10 = arith.truncf %9 : vector<128x32xf32> to vector<128x32xbf16>
    %c0_6 = arith.constant 0 : index
    %c0_7 = arith.constant 0 : index
    %11 = vector.load %arg4[%c0_6, %c0_7] : memref<32x16xbf16, #tpu.memory_space<vmem>>, vector<32x16xbf16>
    %cst_8 = arith.constant dense<0.000000e+00> : vector<128x16xf32>
    %12 = tpu.matmul %10, %11, %cst_8 {dimension_numbers = #tpu.dot_dimension_numbers<[1], [0], [0], [1], [0, 0, 1, 1], [], []>} : vector<128x32xbf16>, vector<32x16xbf16>, vector<128x16xf32> -> vector<128x16xf32>
    %c0_9 = arith.constant 0 : index
    %c0_10 = arith.constant 0 : index
    %13 = vector.load %arg5[%c0_9, %c0_10] : memref<1x16xf32, #tpu.memory_space<vmem>>, vector<1x16xf32>
    %14 = vector.broadcast %13 : vector<1x16xf32> to vector<128x16xf32>
    %15 = arith.addf %12, %14 : vector<128x16xf32>
    %cst_11 = arith.constant 2.000000e-01 : f32
    %16 = vector.broadcast %cst_11 : f32 to vector<128x16xf32>
    %17 = arith.mulf %16, %15 : vector<128x16xf32>
    %18 = arith.maximumf %15, %17 : vector<128x16xf32>
    %c0_12 = arith.constant 0 : index
    %c0_13 = arith.constant 0 : index
    %19 = vector.load %arg6[%c0_12, %c0_13] : memref<1x16xbf16, #tpu.memory_space<vmem>>, vector<1x16xbf16>
    %20 = arith.truncf %18 : vector<128x16xf32> to vector<128x16xbf16>
    %cst_14 = arith.constant dense<0.000000e+00> : vector<1x128xf32>
    %21 = tpu.matmul %19, %20, %cst_14 {dimension_numbers = #tpu.dot_dimension_numbers<[1], [1], [0], [0], [0, 0, 1, 0], [], []>} : vector<1x16xbf16>, vector<128x16xbf16>, vector<1x128xf32> -> vector<1x128xf32>
    %c0_15 = arith.constant 0 : index
    %c0_16 = arith.constant 0 : index
    %22 = vector.load %arg7[%c0_15, %c0_16] : memref<1x1xf32, #tpu.memory_space<vmem>>, vector<1x1xf32>
    %23 = vector.broadcast %22 : vector<1x1xf32> to vector<1x128xf32>
    %24 = arith.addf %21, %23 : vector<1x128xf32>
    %c0_17 = arith.constant 0 : index
    %c0_18 = arith.constant 0 : index
    %25 = vector.load %arg8[%c0_17, %c0_18] : memref<1x128xf32, #tpu.memory_space<vmem>>, vector<1x128xf32>
    tpu.vector_store %arg8[%c0_17, %c0_18], %24 {strides = array<i32>} : memref<1x128xf32, #tpu.memory_space<vmem>>, vector<1x128xf32>,
    return
  }
  func.func @transform_0(%arg0: i32) -> (i32, i32) {
    %c0_i32 = arith.constant 0 : i32
    %c0_i32_0 = arith.constant 0 : i32
    return %arg0, %c0_i32 : i32, i32
  }
  func.func @transform_1(%arg0: i32) -> (i32, i32) {
    %c0_i32 = arith.constant 0 : i32
    %c0_i32_0 = arith.constant 0 : i32
    %c0_i32_1 = arith.constant 0 : i32
    return %c0_i32, %c0_i32_0 : i32, i32
  }
  func.func @transform_2(%arg0: i32) -> (i32, i32) {
    %c0_i32 = arith.constant 0 : i32
    %c0_i32_0 = arith.constant 0 : i32
    %c0_i32_1 = arith.constant 0 : i32
    return %c0_i32, %c0_i32_0 : i32, i32
  }
  func.func @transform_3(%arg0: i32) -> (i32, i32) {
    %c0_i32 = arith.constant 0 : i32
    %c0_i32_0 = arith.constant 0 : i32
    %c0_i32_1 = arith.constant 0 : i32
    return %c0_i32, %c0_i32_0 : i32, i32
  }
  func.func @transform_4(%arg0: i32) -> (i32, i32) {
    %c0_i32 = arith.constant 0 : i32
    %c0_i32_0 = arith.constant 0 : i32
    %c0_i32_1 = arith.constant 0 : i32
    return %c0_i32, %c0_i32_0 : i32, i32
  }
  func.func @transform_5(%arg0: i32) -> (i32, i32) {
    %c0_i32 = arith.constant 0 : i32
    %c0_i32_0 = arith.constant 0 : i32
    %c0_i32_1 = arith.constant 0 : i32
    return %c0_i32, %c0_i32_0 : i32, i32
  }
  func.func @transform_6(%arg0: i32) -> (i32, i32) {
    %c0_i32 = arith.constant 0 : i32
    %c0_i32_0 = arith.constant 0 : i32
    %c0_i32_1 = arith.constant 0 : i32
    return %c0_i32, %c0_i32_0 : i32, i32
  }
  func.func @transform_7(%arg0: i32) -> (i32, i32) {
    %c0_i32 = arith.constant 0 : i32
    %c0_i32_0 = arith.constant 0 : i32
    return %c0_i32, %arg0 : i32, i32
  }
}

</mosaic_0001>

<llo_original>
// kernel: tpu_custom_call.1
$region0: #{tpu_custom_call.1}
  #allocation0 [shape = 'u32[]', space=smem, size = 0x4, offset = 0x4, fixed_abs, tag = 'smem constant byte address 0x4 - core index']
  #allocation1 [shape = 'u32[72,128]{1,0:T(1,128)}', space=vmem, size = 0x9000, scoped, tag = 'internal scratch']
  #allocation2 [shape = 'f32[1,1]{1,0:T(1,128)S(1)}', space=vmem, size = 0x200, scoped, tag = 'scoped memory for tpu_custom_call.1']
  %s0 = inlined_call_operand.vmem [shape: f32[8,32], index: 0, kind: input, shape index: {}]
  %s1 = inlined_call_operand.vmem [shape: bf16[32,32], index: 1, kind: input, shape index: {}]
  %s2 = inlined_call_operand.vmem [shape: f32[1,32], index: 2, kind: input, shape index: {}]
  %s3 = inlined_call_operand.vmem [shape: bf16[32,16], index: 3, kind: input, shape index: {}]
  %s4 = inlined_call_operand.vmem [shape: f32[1,16], index: 4, kind: input, shape index: {}]
  %s5 = inlined_call_operand.vmem [shape: bf16[1,16], index: 5, kind: input, shape index: {}]
  %s6 = inlined_call_operand.<no memory space> [shape: f32[1,1], index: 6, kind: input, shape index: {}]
  %s7 = inlined_call_operand.hbm [shape: f32[1,128], index: 7, kind: output, shape index: {}]
  %s8 = sld [smem:[#allocation0]]
  $region38: #{tpu_custom_call.1} parent=0
    _
  %s10 = ssub.s32 1, %s8
  %s11 = scalar_select 0, %s10, %s8
  %v12 = vstv %s6
  %13 = vst [vmem:[#allocation2] sm:$0x1] %v12
  $region1: #{tpu_custom_call.1} parent=0
    #allocation3 [shape = 'u8[512]{0}', space=vmem, size = 0x400, scoped, tag = 'output window, operand 0, single buffered']
    #allocation4 [shape = 's32[1]{0}', space=sflag, size = 0x4, scoped, tag = 'scoped memory for tpu_custom_call.1']
    %14 = vsyncpa [#allocation4], 0
    // Predicated region
    $region2: #{tpu_custom_call.1} parent=1 // pred_check
      _
    $region3: #{tpu_custom_call.1} parent=1 // pred_check_branch
      %16 = sbr.rel (0) target = $region5
    $region4: #{tpu_custom_call.1} parent=1 // pred_region
      _
    $region5: #{tpu_custom_call.1} parent=1 // pred_fallthru
      _
    // Predicated region
    $region6: #{tpu_custom_call.1} parent=1 // pred_check
      _
    $region7: #{tpu_custom_call.1} parent=1 // pred_check_branch
      %18 = sbr.rel (0) target = $region9
    $region8: #{tpu_custom_call.1} parent=1 // pred_region
      _
    $region9: #{tpu_custom_call.1} parent=1 // pred_fallthru
      _
    // Predicated region
    $region10: #{tpu_custom_call.1} parent=1 // pred_check
      _
    $region11: #{tpu_custom_call.1} parent=1 // pred_check_branch
      %20 = sbr.rel (0) target = $region13
    $region12: #{tpu_custom_call.1} parent=1 // pred_region
      _
    $region13: #{tpu_custom_call.1} parent=1 // pred_fallthru
      _
    // Predicated region
    $region14: #{tpu_custom_call.1} parent=1 // pred_check
      _
    $region15: #{tpu_custom_call.1} parent=1 // pred_check_branch
      %22 = sbr.rel (0) target = $region17
    $region16: #{tpu_custom_call.1} parent=1 // pred_region
      _
    $region17: #{tpu_custom_call.1} parent=1 // pred_fallthru
      _
    // Predicated region
    $region18: #{tpu_custom_call.1} parent=1 // pred_check
      _
    $region19: #{tpu_custom_call.1} parent=1 // pred_check_branch
      %24 = sbr.rel (0) target = $region21
    $region20: #{tpu_custom_call.1} parent=1 // pred_region
      _
    $region21: #{tpu_custom_call.1} parent=1 // pred_fallthru
      _
    // Predicated region
    $region22: #{tpu_custom_call.1} parent=1 // pred_check
      _
    $region23: #{tpu_custom_call.1} parent=1 // pred_check_branch
      %26 = sbr.rel (0) target = $region25
    $region24: #{tpu_custom_call.1} parent=1 // pred_region
      _
    $region25: #{tpu_custom_call.1} parent=1 // pred_fallthru
      _
    // Predicated region
    $region26: #{tpu_custom_call.1} parent=1 // pred_check
      _
    $region27: #{tpu_custom_call.1} parent=1 // pred_check_branch
      %28 = sbr.rel (0) target = $region29
    $region28: #{tpu_custom_call.1} parent=1 // pred_region
      _
    $region29: #{tpu_custom_call.1} parent=1 // pred_fallthru
      _
    %v30 = vld [vmem:[%s0] sm:$0xff]
    %v31 = vld [vmem:[%s0 + $0x8] sm:$0xff]
    %v32 = vld [vmem:[%s0 + $0x10] sm:$0xff]
    %v33 = vld [vmem:[%s0 + $0x18] sm:$0xff]
    %v34 = vld [vmem:[%s0 + $0x20] sm:$0xff]
    %v35 = vld [vmem:[%s0 + $0x28] sm:$0xff]
    %v36 = vld [vmem:[%s0 + $0x30] sm:$0xff]
    %v37 = vld [vmem:[%s0 + $0x38] sm:$0xff]
    %v38 = vld [vmem:[%s0 + $0x40] sm:$0xff]
    %v39 = vld [vmem:[%s0 + $0x48] sm:$0xff]
    %v40 = vld [vmem:[%s0 + $0x50] sm:$0xff]
    %v41 = vld [vmem:[%s0 + $0x58] sm:$0xff]
    %v42 = vld [vmem:[%s0 + $0x60] sm:$0xff]
    %v43 = vld [vmem:[%s0 + $0x68] sm:$0xff]
    %v44 = vld [vmem:[%s0 + $0x70] sm:$0xff]
    %v45 = vld [vmem:[%s0 + $0x78] sm:$0xff]
    %v46 = vpack.c.bf16 %v31, %v30
    %v47 = vpack.c.bf16 %v33, %v32
    %v48 = vpack.c.bf16 %v35, %v34
    %v49 = vpack.c.bf16 %v37, %v36
    %v50 = vpack.c.bf16 %v39, %v38
    %v51 = vpack.c.bf16 %v41, %v40
    %v52 = vpack.c.bf16 %v43, %v42
    %v53 = vpack.c.bf16 %v45, %v44
    %v54 = vld [vmem:[%s1] sm:$0xf]
    %v55 = vld [vmem:[%s1 + $0x4] sm:$0xf]
    %v56 = vld [vmem:[%s1 + $0x8] sm:$0xf]
    %v57 = vld [vmem:[%s1 + $0xc] sm:$0xf]
    %v58 = vld [vmem:[%s2] sm:$0x1]
    %v60 = vperm.slane %v58, 0
    %v66 = vunpack.c.l.b16 %v54
    %v67 = vunpack.c.l.b16 %v55
    %v68 = vunpack.c.l.b16 %v56
    %v69 = vunpack.c.l.b16 %v57
    %v70 = vpack.c.b16 %v67, %v66
    %v71 = vpack.c.b16 %v69, %v68
    %vm74 = vcmask 261120
    %v76 = vsel %vm74, %v46, 0
    %v79 = vsel %vm74, %v47, 0
    %v82 = vsel %vm74, %v48, 0
    %v85 = vsel %vm74, %v49, 0
    %v88 = vsel %vm74, %v50, 0
    %v91 = vsel %vm74, %v51, 0
    %v94 = vsel %vm74, %v52, 0
    %v97 = vsel %vm74, %v53, 0
    %99 = vmatpush.bf16.msra.mxu0 0
    %100 = vmatpush.bf16.msra.mxu0 0
    %101 = vmatpush.bf16.msra.mxu0 0
    %102 = vmatpush.bf16.msra.mxu0 0
    %103 = vmatpush.bf16.msra.mxu0 0
    %104 = vmatpush.bf16.msra.mxu0 0
    %105 = vmatpush.bf16.msra.mxu0 %v71
    %106 = vmatpush.bf16.msra.mxu0 %v70
    %107 = vmatmul.bf16.gmra.mxu0 %v76
    %v108 = vpop.f32.mrf.mxu0
    %v109 = vadd.f32 %v60, %v108
    %v110 = vpop.f32.mrf.mxu0
    %v111 = vadd.f32 %v60, %v110
    %112 = vmatmul.bf16.gmra.mxu0 %v79
    %v113 = vpop.f32.mrf.mxu0
    %v114 = vadd.f32 %v60, %v113
    %v115 = vpop.f32.mrf.mxu0
    %v116 = vadd.f32 %v60, %v115
    %117 = vmatmul.bf16.gmra.mxu0 %v82
    %v118 = vpop.f32.mrf.mxu0
    %v119 = vadd.f32 %v60, %v118
    %v120 = vpop.f32.mrf.mxu0
    %v121 = vadd.f32 %v60, %v120
    %122 = vmatmul.bf16.gmra.mxu0 %v85
    %v123 = vpop.f32.mrf.mxu0
    %v124 = vadd.f32 %v60, %v123
    %v125 = vpop.f32.mrf.mxu0
    %v126 = vadd.f32 %v60, %v125
    %127 = vmatmul.bf16.gmra.mxu0 %v88
    %v128 = vpop.f32.mrf.mxu0
    %v129 = vadd.f32 %v60, %v128
    %v130 = vpop.f32.mrf.mxu0
    %v131 = vadd.f32 %v60, %v130
    %132 = vmatmul.bf16.gmra.mxu0 %v91
    %v133 = vpop.f32.mrf.mxu0
    %v134 = vadd.f32 %v60, %v133
    %v135 = vpop.f32.mrf.mxu0
    %v136 = vadd.f32 %v60, %v135
    %137 = vmatmul.bf16.gmra.mxu0 %v94
    %v138 = vpop.f32.mrf.mxu0
    %v139 = vadd.f32 %v60, %v138
    %v140 = vpop.f32.mrf.mxu0
    %v141 = vadd.f32 %v60, %v140
    %142 = vmatmul.bf16.gmra.mxu0 %v97
    %v143 = vpop.f32.mrf.mxu0
    %v144 = vadd.f32 %v60, %v143
    %v145 = vpop.f32.mrf.mxu0
    %v146 = vadd.f32 %v60, %v145
    %147 = vdwg.mxu0
    %v148 = vmul.f32 %v109, 0.2
    %v149 = vmul.f32 %v111, 0.2
    %v150 = vmul.f32 %v114, 0.2
    %v151 = vmul.f32 %v116, 0.2
    %v152 = vmul.f32 %v119, 0.2
    %v153 = vmul.f32 %v121, 0.2
    %v154 = vmul.f32 %v124, 0.2
    %v155 = vmul.f32 %v126, 0.2
    %v156 = vmul.f32 %v129, 0.2
    %v157 = vmul.f32 %v131, 0.2
    %v158 = vmul.f32 %v134, 0.2
    %v159 = vmul.f32 %v136, 0.2
    %v160 = vmul.f32 %v139, 0.2
    %v161 = vmul.f32 %v141, 0.2
    %v162 = vmul.f32 %v144, 0.2
    %v163 = vmul.f32 %v146, 0.2
    %v164 = vmax.f32 %v109, %v148
    %v165 = vmax.f32 %v111, %v149
    %v166 = vmax.f32 %v114, %v150
    %v167 = vmax.f32 %v116, %v151
    %v168 = vmax.f32 %v119, %v152
    %v169 = vmax.f32 %v121, %v153
    %v170 = vmax.f32 %v124, %v154
    %v171 = vmax.f32 %v126, %v155
    %v172 = vmax.f32 %v129, %v156
    %v173 = vmax.f32 %v131, %v157
    %v174 = vmax.f32 %v134, %v158
    %v175 = vmax.f32 %v136, %v159
    %v176 = vmax.f32 %v139, %v160
    %v177 = vmax.f32 %v141, %v161
    %v178 = vmax.f32 %v144, %v162
    %v179 = vmax.f32 %v146, %v163
    %v180 = vpack.c.bf16 %v165, %v164
    %v181 = vpack.c.bf16 %v167, %v166
    %v182 = vpack.c.bf16 %v169, %v168
    %v183 = vpack.c.bf16 %v171, %v170
    %v184 = vpack.c.bf16 %v173, %v172
    %v185 = vpack.c.bf16 %v175, %v174
    %v186 = vpack.c.bf16 %v177, %v176
    %v187 = vpack.c.bf16 %v179, %v178
    %v188 = vld [vmem:[%s3] sm:$0xf]
    %v189 = vld [vmem:[%s3 + $0x4] sm:$0xf]
    %v190 = vld [vmem:[%s3 + $0x8] sm:$0xf]
    %v191 = vld [vmem:[%s3 + $0xc] sm:$0xf]
    %v192 = vld [vmem:[%s4] sm:$0x1]
    %v194 = vperm.slane %v192, 0
    %v200 = vunpack.c.l.b16 %v188
    %v201 = vunpack.c.l.b16 %v189
    %v202 = vunpack.c.l.b16 %v190
    %v203 = vunpack.c.l.b16 %v191
    %v204 = vpack.c.b16 %v201, %v200
    %v205 = vpack.c.b16 %v203, %v202
    %v209 = vsel %vm74, %v180, 0
    %v212 = vsel %vm74, %v181, 0
    %v215 = vsel %vm74, %v182, 0
    %v218 = vsel %vm74, %v183, 0
    %v221 = vsel %vm74, %v184, 0
    %v224 = vsel %vm74, %v185, 0
    %v227 = vsel %vm74, %v186, 0
    %v230 = vsel %vm74, %v187, 0
    %232 = vmatpush.bf16.msra.mxu0 0
    %233 = vmatpush.bf16.msra.mxu0 0
    %234 = vmatpush.bf16.msra.mxu0 0
    %235 = vmatpush.bf16.msra.mxu0 0
    %236 = vmatpush.bf16.msra.mxu0 0
    %237 = vmatpush.bf16.msra.mxu0 0
    %238 = vmatpush.bf16.msra.mxu0 %v205
    %239 = vmatpush.bf16.msra.mxu0 %v204
    %240 = vmatmul.bf16.gmra.mxu0 %v209
    %v241 = vpop.f32.mrf.mxu0
    %v242 = vadd.f32 %v194, %v241
    %v243 = vpop.f32.mrf.mxu0
    %v244 = vadd.f32 %v194, %v243
    %245 = vmatmul.bf16.gmra.mxu0 %v212
    %v246 = vpop.f32.mrf.mxu0
    %v247 = vadd.f32 %v194, %v246
    %v248 = vpop.f32.mrf.mxu0
    %v249 = vadd.f32 %v194, %v248
    %250 = vmatmul.bf16.gmra.mxu0 %v215
    %v251 = vpop.f32.mrf.mxu0
    %v252 = vadd.f32 %v194, %v251
    %v253 = vpop.f32.mrf.mxu0
    %v254 = vadd.f32 %v194, %v253
    %255 = vmatmul.bf16.gmra.mxu0 %v218
    %v256 = vpop.f32.mrf.mxu0
    %v257 = vadd.f32 %v194, %v256
    %v258 = vpop.f32.mrf.mxu0
    %v259 = vadd.f32 %v194, %v258
    %260 = vmatmul.bf16.gmra.mxu0 %v221
    %v261 = vpop.f32.mrf.mxu0
    %v262 = vadd.f32 %v194, %v261
    %v263 = vpop.f32.mrf.mxu0
    %v264 = vadd.f32 %v194, %v263
    %265 = vmatmul.bf16.gmra.mxu0 %v224
    %v266 = vpop.f32.mrf.mxu0
    %v267 = vadd.f32 %v194, %v266
    %v268 = vpop.f32.mrf.mxu0
    %v269 = vadd.f32 %v194, %v268
    %270 = vmatmul.bf16.gmra.mxu0 %v227
    %v271 = vpop.f32.mrf.mxu0
    %v272 = vadd.f32 %v194, %v271
    %v273 = vpop.f32.mrf.mxu0
    %v274 = vadd.f32 %v194, %v273
    %275 = vmatmul.bf16.gmra.mxu0 %v230
    %v276 = vpop.f32.mrf.mxu0
    %v277 = vadd.f32 %v194, %v276
    %v278 = vpop.f32.mrf.mxu0
    %v279 = vadd.f32 %v194, %v278
    %280 = vdwg.mxu0
    %v281 = vmul.f32 %v242, 0.2
    %v282 = vmul.f32 %v244, 0.2
    %v283 = vmul.f32 %v247, 0.2
    %v284 = vmul.f32 %v249, 0.2
    %v285 = vmul.f32 %v252, 0.2
    %v286 = vmul.f32 %v254, 0.2
    %v287 = vmul.f32 %v257, 0.2
    %v288 = vmul.f32 %v259, 0.2
    %v289 = vmul.f32 %v262, 0.2
    %v290 = vmul.f32 %v264, 0.2
    %v291 = vmul.f32 %v267, 0.2
    %v292 = vmul.f32 %v269, 0.2
    %v293 = vmul.f32 %v272, 0.2
    %v294 = vmul.f32 %v274, 0.2
    %v295 = vmul.f32 %v277, 0.2
    %v296 = vmul.f32 %v279, 0.2
    %v297 = vmax.f32 %v242, %v281
    %v298 = vmax.f32 %v244, %v282
    %v299 = vmax.f32 %v247, %v283
    %v300 = vmax.f32 %v249, %v284
    %v301 = vmax.f32 %v252, %v285
    %v302 = vmax.f32 %v254, %v286
    %v303 = vmax.f32 %v257, %v287
    %v304 = vmax.f32 %v259, %v288
    %v305 = vmax.f32 %v262, %v289
    %v306 = vmax.f32 %v264, %v290
    %v307 = vmax.f32 %v267, %v291
    %v308 = vmax.f32 %v269, %v292
    %v309 = vmax.f32 %v272, %v293
    %v310 = vmax.f32 %v274, %v294
    %v311 = vmax.f32 %v277, %v295
    %v312 = vmax.f32 %v279, %v296
    %v313 = vld [vmem:[%s5] sm:$0x1]
    %v314 = vpack.c.bf16 %v298, %v297
    %v315 = vpack.c.bf16 %v300, %v299
    %v316 = vpack.c.bf16 %v302, %v301
    %v317 = vpack.c.bf16 %v304, %v303
    %v318 = vpack.c.bf16 %v306, %v305
    %v319 = vpack.c.bf16 %v308, %v307
    %v320 = vpack.c.bf16 %v310, %v309
    %v321 = vpack.c.bf16 %v312, %v311
    %v322 = vld [vmem:[#allocation2] sm:$0x1]
    %324 = vset.pattern.permute.xlu0 0
    %325 = vperm.xlu0 %324, %v322
    %v326 = vpop.permute.xlu0 %325
    %v328 = vperm.slane %v326, 0
    %vm329 = vcmask 130048
    %v331 = vsel %vm329, %v313, 0
    %v334 = vsel %vm329, %v314, 0
    %v337 = vsel %vm329, %v315, 0
    %v340 = vsel %vm329, %v316, 0
    %v343 = vsel %vm329, %v317, 0
    %v346 = vsel %vm329, %v318, 0
    %v349 = vsel %vm329, %v319, 0
    %v352 = vsel %vm329, %v320, 0
    %v355 = vsel %vm329, %v321, 0
    %357 = vmatpush.bf16.xpose.msra.mxu0 %v355
    %358 = vmatpush.bf16.xpose.msra.mxu0 %v352
    %359 = vmatpush.bf16.xpose.msra.mxu0 %v349
    %360 = vmatpush.bf16.xpose.msra.mxu0 %v346
    %361 = vmatpush.bf16.xpose.msra.mxu0 %v343
    %362 = vmatpush.bf16.xpose.msra.mxu0 %v340
    %363 = vmatpush.bf16.xpose.msra.mxu0 %v337
    %364 = vmatpush.bf16.xpose.msra.mxu0 %v334
    %365 = vmatmul.bf16.gmra.mxu0 %v331
    %v366 = vpop.f32.mrf.mxu0
    %v367 = vadd.f32 %v328, %v366
    %v368 = vpop.f32.mrf.mxu0
    %369 = vdwg.mxu0
    %370 = vst [vmem:[#allocation3] sm:$0x1] %v367
    // Predicated region
    $region30: #{tpu_custom_call.1} parent=1 // pred_check
      _
    $region31: #{tpu_custom_call.1} parent=1 // pred_check_branch
      %372 = sbr.rel (0) target = $region33
    $region32: #{tpu_custom_call.1} parent=1 // pred_region
      %374 = vsyncadd [#allocation4], 0
      %s376 = sshll.u32 [#allocation3], 4
      %s377 = int_to_ptr.vmem [resolvable:$true] %s376
      %s378 = sshll.u32 %s7, 4
      %s379 = int_to_ptr.hbm [resolvable:$true] %s378
      %381 = dma.vmem_to_hbm [thread:$0]  %s377, 16, %s379, [#allocation4]
    $region33: #{tpu_custom_call.1} parent=1 // pred_fallthru
      _
    // Predicated region
    $region34: #{tpu_custom_call.1} parent=1 // pred_check
      _
    $region35: #{tpu_custom_call.1} parent=1 // pred_check_branch
      %383 = sbr.rel (0) target = $region37
    $region36: #{tpu_custom_call.1} parent=1 // pred_region
      %385 = dma.done [#allocation4], 16
    $region37: #{tpu_custom_call.1} parent=1 // pred_fallthru
      _
    %386 = vsyncpa [#allocation4], 1

// kernel: tpu_custom_call.1
$region0: #{tpu_custom_call.1}
  #allocation0 [shape = 'u32[]', space=smem, size = 0x4, offset = 0x4, fixed_abs, tag = 'smem constant byte address 0x4 - core index']
  #allocation1 [shape = 'u32[72,128]{1,0:T(1,128)}', space=vmem, size = 0x9000, scoped, tag = 'internal scratch']
  #allocation2 [shape = 'f32[1,1]{1,0:T(1,128)S(1)}', space=vmem, size = 0x200, scoped, tag = 'scoped memory for tpu_custom_call.1']
  %s0 = inlined_call_operand.vmem [shape: f32[8,32], index: 0, kind: input, shape index: {}]
  %s1 = inlined_call_operand.vmem [shape: bf16[32,32], index: 1, kind: input, shape index: {}]
  %s2 = inlined_call_operand.vmem [shape: f32[1,32], index: 2, kind: input, shape index: {}]
  %s3 = inlined_call_operand.vmem [shape: bf16[32,16], index: 3, kind: input, shape index: {}]
  %s4 = inlined_call_operand.vmem [shape: f32[1,16], index: 4, kind: input, shape index: {}]
  %s5 = inlined_call_operand.vmem [shape: bf16[1,16], index: 5, kind: input, shape index: {}]
  %s6 = inlined_call_operand.<no memory space> [shape: f32[1,1], index: 6, kind: input, shape index: {}]
  %s7 = inlined_call_operand.hbm [shape: f32[1,128], index: 7, kind: output, shape index: {}]
  %s8 = sld [smem:[#allocation0]]
  $region38: #{tpu_custom_call.1} parent=0
    _
  %s10 = ssub.s32 1, %s8
  %s11 = scalar_select 0, %s10, %s8
  %v12 = vstv %s6
  %13 = vst [vmem:[#allocation2] sm:$0x1] %v12
  $region1: #{tpu_custom_call.1} parent=0
    #allocation3 [shape = 'u8[512]{0}', space=vmem, size = 0x400, scoped, tag = 'output window, operand 0, single buffered']
    #allocation4 [shape = 's32[1]{0}', space=sflag, size = 0x4, scoped, tag = 'scoped memory for tpu_custom_call.1']
    %14 = vsyncpa [#allocation4], 0
    // Predicated region
    $region2: #{tpu_custom_call.1} parent=1 // pred_check
      _
    $region3: #{tpu_custom_call.1} parent=1 // pred_check_branch
      %16 = sbr.rel (0) target = $region5
    $region4: #{tpu_custom_call.1} parent=1 // pred_region
      _
    $region5: #{tpu_custom_call.1} parent=1 // pred_fallthru
      _
    // Predicated region
    $region6: #{tpu_custom_call.1} parent=1 // pred_check
      _
    $region7: #{tpu_custom_call.1} parent=1 // pred_check_branch
      %18 = sbr.rel (0) target = $region9
    $region8: #{tpu_custom_call.1} parent=1 // pred_region
      _
    $region9: #{tpu_custom_call.1} parent=1 // pred_fallthru
      _
    // Predicated region
    $region10: #{tpu_custom_call.1} parent=1 // pred_check
      _
    $region11: #{tpu_custom_call.1} parent=1 // pred_check_branch
      %20 = sbr.rel (0) target = $region13
    $region12: #{tpu_custom_call.1} parent=1 // pred_region
      _
    $region13: #{tpu_custom_call.1} parent=1 // pred_fallthru
      _
    // Predicated region
    $region14: #{tpu_custom_call.1} parent=1 // pred_check
      _
    $region15: #{tpu_custom_call.1} parent=1 // pred_check_branch
      %22 = sbr.rel (0) target = $region17
    $region16: #{tpu_custom_call.1} parent=1 // pred_region
      _
    $region17: #{tpu_custom_call.1} parent=1 // pred_fallthru
      _
    // Predicated region
    $region18: #{tpu_custom_call.1} parent=1 // pred_check
      _
    $region19: #{tpu_custom_call.1} parent=1 // pred_check_branch
      %24 = sbr.rel (0) target = $region21
    $region20: #{tpu_custom_call.1} parent=1 // pred_region
      _
    $region21: #{tpu_custom_call.1} parent=1 // pred_fallthru
      _
    // Predicated region
    $region22: #{tpu_custom_call.1} parent=1 // pred_check
      _
    $region23: #{tpu_custom_call.1} parent=1 // pred_check_branch
      %26 = sbr.rel (0) target = $region25
    $region24: #{tpu_custom_call.1} parent=1 // pred_region
      _
    $region25: #{tpu_custom_call.1} parent=1 // pred_fallthru
      _
    // Predicated region
    $region26: #{tpu_custom_call.1} parent=1 // pred_check
      _
    $region27: #{tpu_custom_call.1} parent=1 // pred_check_branch
      %28 = sbr.rel (0) target = $region29
    $region28: #{tpu_custom_call.1} parent=1 // pred_region
      _
    $region29: #{tpu_custom_call.1} parent=1 // pred_fallthru
      _
    %v30 = vld [vmem:[%s0] sm:$0xff]
    %v31 = vld [vmem:[%s0 + $0x8] sm:$0xff]
    %v32 = vld [vmem:[%s0 + $0x10] sm:$0xff]
    %v33 = vld [vmem:[%s0 + $0x18] sm:$0xff]
    %v34 = vld [vmem:[%s0 + $0x20] sm:$0xff]
    %v35 = vld [vmem:[%s0 + $0x28] sm:$0xff]
    %v36 = vld [vmem:[%s0 + $0x30] sm:$0xff]
    %v37 = vld [vmem:[%s0 + $0x38] sm:$0xff]
    %v38 = vld [vmem:[%s0 + $0x40] sm:$0xff]
    %v39 = vld [vmem:[%s0 + $0x48] sm:$0xff]
    %v40 = vld [vmem:[%s0 + $0x50] sm:$0xff]
    %v41 = vld [vmem:[%s0 + $0x58] sm:$0xff]
    %v42 = vld [vmem:[%s0 + $0x60] sm:$0xff]
    %v43 = vld [vmem:[%s0 + $0x68] sm:$0xff]
    %v44 = vld [vmem:[%s0 + $0x70] sm:$0xff]
    %v45 = vld [vmem:[%s0 + $0x78] sm:$0xff]
    %v46 = vpack.c.bf16 %v31, %v30
    %v47 = vpack.c.bf16 %v33, %v32
    %v48 = vpack.c.bf16 %v35, %v34
    %v49 = vpack.c.bf16 %v37, %v36
    %v50 = vpack.c.bf16 %v39, %v38
    %v51 = vpack.c.bf16 %v41, %v40
    %v52 = vpack.c.bf16 %v43, %v42
    %v53 = vpack.c.bf16 %v45, %v44
    %v54 = vld [vmem:[%s1] sm:$0xf]
    %v55 = vld [vmem:[%s1 + $0x4] sm:$0xf]
    %v56 = vld [vmem:[%s1 + $0x8] sm:$0xf]
    %v57 = vld [vmem:[%s1 + $0xc] sm:$0xf]
    %v58 = vld [vmem:[%s2] sm:$0x1]
    %v60 = vperm.slane %v58, 0
    %v66 = vunpack.c.l.b16 %v54
    %v67 = vunpack.c.l.b16 %v55
    %v68 = vunpack.c.l.b16 %v56
    %v69 = vunpack.c.l.b16 %v57
    %v70 = vpack.c.b16 %v67, %v66
    %v71 = vpack.c.b16 %v69, %v68
    %vm74 = vcmask 261120
    %v76 = vsel %vm74, %v46, 0
    %v79 = vsel %vm74, %v47, 0
    %v82 = vsel %vm74, %v48, 0
    %v85 = vsel %vm74, %v49, 0
    %v88 = vsel %vm74, %v50, 0
    %v91 = vsel %vm74, %v51, 0
    %v94 = vsel %vm74, %v52, 0
    %v97 = vsel %vm74, %v53, 0
    %99 = vmatpush.bf16.msra.mxu0 0
    %100 = vmatpush.bf16.msra.mxu0 0
    %101 = vmatpush.bf16.msra.mxu0 0
    %102 = vmatpush.bf16.msra.mxu0 0
    %103 = vmatpush.bf16.msra.mxu0 0
    %104 = vmatpush.bf16.msra.mxu0 0
    %105 = vmatpush.bf16.msra.mxu0 %v71
    %106 = vmatpush.bf16.msra.mxu0 %v70
    %107 = vmatmul.bf16.gmra.mxu0 %v76
    %v108 = vpop.f32.mrf.mxu0
    %v109 = vadd.f32 %v60, %v108
    %v110 = vpop.f32.mrf.mxu0
    %v111 = vadd.f32 %v60, %v110
    %112 = vmatmul.bf16.gmra.mxu0 %v79
    %v113 = vpop.f32.mrf.mxu0
    %v114 = vadd.f32 %v60, %v113
    %v115 = vpop.f32.mrf.mxu0
    %v116 = vadd.f32 %v60, %v115
    %117 = vmatmul.bf16.gmra.mxu0 %v82
    %v118 = vpop.f32.mrf.mxu0
    %v119 = vadd.f32 %v60, %v118
    %v120 = vpop.f32.mrf.mxu0
    %v121 = vadd.f32 %v60, %v120
    %122 = vmatmul.bf16.gmra.mxu0 %v85
    %v123 = vpop.f32.mrf.mxu0
    %v124 = vadd.f32 %v60, %v123
    %v125 = vpop.f32.mrf.mxu0
    %v126 = vadd.f32 %v60, %v125
    %127 = vmatmul.bf16.gmra.mxu0 %v88
    %v128 = vpop.f32.mrf.mxu0
    %v129 = vadd.f32 %v60, %v128
    %v130 = vpop.f32.mrf.mxu0
    %v131 = vadd.f32 %v60, %v130
    %132 = vmatmul.bf16.gmra.mxu0 %v91
    %v133 = vpop.f32.mrf.mxu0
    %v134 = vadd.f32 %v60, %v133
    %v135 = vpop.f32.mrf.mxu0
    %v136 = vadd.f32 %v60, %v135
    %137 = vmatmul.bf16.gmra.mxu0 %v94
    %v138 = vpop.f32.mrf.mxu0
    %v139 = vadd.f32 %v60, %v138
    %v140 = vpop.f32.mrf.mxu0
    %v141 = vadd.f32 %v60, %v140
    %142 = vmatmul.bf16.gmra.mxu0 %v97
    %v143 = vpop.f32.mrf.mxu0
    %v144 = vadd.f32 %v60, %v143
    %v145 = vpop.f32.mrf.mxu0
    %v146 = vadd.f32 %v60, %v145
    %147 = vdwg.mxu0
    %v148 = vmul.f32 %v109, 0.2
    %v149 = vmul.f32 %v111, 0.2
    %v150 = vmul.f32 %v114, 0.2
    %v151 = vmul.f32 %v116, 0.2
    %v152 = vmul.f32 %v119, 0.2
    %v153 = vmul.f32 %v121, 0.2
    %v154 = vmul.f32 %v124, 0.2
    %v155 = vmul.f32 %v126, 0.2
    %v156 = vmul.f32 %v129, 0.2
    %v157 = vmul.f32 %v131, 0.2
    %v158 = vmul.f32 %v134, 0.2
    %v159 = vmul.f32 %v136, 0.2
    %v160 = vmul.f32 %v139, 0.2
    %v161 = vmul.f32 %v141, 0.2
    %v162 = vmul.f32 %v144, 0.2
    %v163 = vmul.f32 %v146, 0.2
    %v164 = vmax.f32 %v109, %v148
    %v165 = vmax.f32 %v111, %v149
    %v166 = vmax.f32 %v114, %v150
    %v167 = vmax.f32 %v116, %v151
    %v168 = vmax.f32 %v119, %v152
    %v169 = vmax.f32 %v121, %v153
    %v170 = vmax.f32 %v124, %v154
    %v171 = vmax.f32 %v126, %v155
    %v172 = vmax.f32 %v129, %v156
    %v173 = vmax.f32 %v131, %v157
    %v174 = vmax.f32 %v134, %v158
    %v175 = vmax.f32 %v136, %v159
    %v176 = vmax.f32 %v139, %v160
    %v177 = vmax.f32 %v141, %v161
    %v178 = vmax.f32 %v144, %v162
    %v179 = vmax.f32 %v146, %v163
    %v180 = vpack.c.bf16 %v165, %v164
    %v181 = vpack.c.bf16 %v167, %v166
    %v182 = vpack.c.bf16 %v169, %v168
    %v183 = vpack.c.bf16 %v171, %v170
    %v184 = vpack.c.bf16 %v173, %v172
    %v185 = vpack.c.bf16 %v175, %v174
    %v186 = vpack.c.bf16 %v177, %v176
    %v187 = vpack.c.bf16 %v179, %v178
    %v188 = vld [vmem:[%s3] sm:$0xf]
    %v189 = vld [vmem:[%s3 + $0x4] sm:$0xf]
    %v190 = vld [vmem:[%s3 + $0x8] sm:$0xf]
    %v191 = vld [vmem:[%s3 + $0xc] sm:$0xf]
    %v192 = vld [vmem:[%s4] sm:$0x1]
    %v194 = vperm.slane %v192, 0
    %v200 = vunpack.c.l.b16 %v188
    %v201 = vunpack.c.l.b16 %v189
    %v202 = vunpack.c.l.b16 %v190
    %v203 = vunpack.c.l.b16 %v191
    %v204 = vpack.c.b16 %v201, %v200
    %v205 = vpack.c.b16 %v203, %v202
    %v209 = vsel %vm74, %v180, 0
    %v212 = vsel %vm74, %v181, 0
    %v215 = vsel %vm74, %v182, 0
    %v218 = vsel %vm74, %v183, 0
    %v221 = vsel %vm74, %v184, 0
    %v224 = vsel %vm74, %v185, 0
    %v227 = vsel %vm74, %v186, 0
    %v230 = vsel %vm74, %v187, 0
    %232 = vmatpush.bf16.msra.mxu0 0
    %233 = vmatpush.bf16.msra.mxu0 0
    %234 = vmatpush.bf16.msra.mxu0 0
    %235 = vmatpush.bf16.msra.mxu0 0
    %236 = vmatpush.bf16.msra.mxu0 0
    %237 = vmatpush.bf16.msra.mxu0 0
    %238 = vmatpush.bf16.msra.mxu0 %v205
    %239 = vmatpush.bf16.msra.mxu0 %v204
    %240 = vmatmul.bf16.gmra.mxu0 %v209
    %v241 = vpop.f32.mrf.mxu0
    %v242 = vadd.f32 %v194, %v241
    %v243 = vpop.f32.mrf.mxu0
    %v244 = vadd.f32 %v194, %v243
    %245 = vmatmul.bf16.gmra.mxu0 %v212
    %v246 = vpop.f32.mrf.mxu0
    %v247 = vadd.f32 %v194, %v246
    %v248 = vpop.f32.mrf.mxu0
    %v249 = vadd.f32 %v194, %v248
    %250 = vmatmul.bf16.gmra.mxu0 %v215
    %v251 = vpop.f32.mrf.mxu0
    %v252 = vadd.f32 %v194, %v251
    %v253 = vpop.f32.mrf.mxu0
    %v254 = vadd.f32 %v194, %v253
    %255 = vmatmul.bf16.gmra.mxu0 %v218
    %v256 = vpop.f32.mrf.mxu0
    %v257 = vadd.f32 %v194, %v256
    %v258 = vpop.f32.mrf.mxu0
    %v259 = vadd.f32 %v194, %v258
    %260 = vmatmul.bf16.gmra.mxu0 %v221
    %v261 = vpop.f32.mrf.mxu0
    %v262 = vadd.f32 %v194, %v261
    %v263 = vpop.f32.mrf.mxu0
    %v264 = vadd.f32 %v194, %v263
    %265 = vmatmul.bf16.gmra.mxu0 %v224
    %v266 = vpop.f32.mrf.mxu0
    %v267 = vadd.f32 %v194, %v266
    %v268 = vpop.f32.mrf.mxu0
    %v269 = vadd.f32 %v194, %v268
    %270 = vmatmul.bf16.gmra.mxu0 %v227
    %v271 = vpop.f32.mrf.mxu0
    %v272 = vadd.f32 %v194, %v271
    %v273 = vpop.f32.mrf.mxu0
    %v274 = vadd.f32 %v194, %v273
    %275 = vmatmul.bf16.gmra.mxu0 %v230
    %v276 = vpop.f32.mrf.mxu0
    %v277 = vadd.f32 %v194, %v276
    %v278 = vpop.f32.mrf.mxu0
    %v279 = vadd.f32 %v194, %v278
    %280 = vdwg.mxu0
    %v281 = vmul.f32 %v242, 0.2
    %v282 = vmul.f32 %v244, 0.2
    %v283 = vmul.f32 %v247, 0.2
    %v284 = vmul.f32 %v249, 0.2
    %v285 = vmul.f32 %v252, 0.2
    %v286 = vmul.f32 %v254, 0.2
    %v287 = vmul.f32 %v257, 0.2
    %v288 = vmul.f32 %v259, 0.2
    %v289 = vmul.f32 %v262, 0.2
    %v290 = vmul.f32 %v264, 0.2
    %v291 = vmul.f32 %v267, 0.2
    %v292 = vmul.f32 %v269, 0.2
    %v293 = vmul.f32 %v272, 0.2
    %v294 = vmul.f32 %v274, 0.2
    %v295 = vmul.f32 %v277, 0.2
    %v296 = vmul.f32 %v279, 0.2
    %v297 = vmax.f32 %v242, %v281
    %v298 = vmax.f32 %v244, %v282
    %v299 = vmax.f32 %v247, %v283
    %v300 = vmax.f32 %v249, %v284
    %v301 = vmax.f32 %v252, %v285
    %v302 = vmax.f32 %v254, %v286
    %v303 = vmax.f32 %v257, %v287
    %v304 = vmax.f32 %v259, %v288
    %v305 = vmax.f32 %v262, %v289
    %v306 = vmax.f32 %v264, %v290
    %v307 = vmax.f32 %v267, %v291
    %v308 = vmax.f32 %v269, %v292
    %v309 = vmax.f32 %v272, %v293
    %v310 = vmax.f32 %v274, %v294
    %v311 = vmax.f32 %v277, %v295
    %v312 = vmax.f32 %v279, %v296
    %v313 = vld [vmem:[%s5] sm:$0x1]
    %v314 = vpack.c.bf16 %v298, %v297
    %v315 = vpack.c.bf16 %v300, %v299
    %v316 = vpack.c.bf16 %v302, %v301
    %v317 = vpack.c.bf16 %v304, %v303
    %v318 = vpack.c.bf16 %v306, %v305
    %v319 = vpack.c.bf16 %v308, %v307
    %v320 = vpack.c.bf16 %v310, %v309
    %v321 = vpack.c.bf16 %v312, %v311
    %v322 = vld [vmem:[#allocation2] sm:$0x1]
    %324 = vset.pattern.permute.xlu0 0
    %325 = vperm.xlu0 %324, %v322
    %v326 = vpop.permute.xlu0 %325
    %v328 = vperm.slane %v326, 0
    %vm329 = vcmask 130048
    %v331 = vsel %vm329, %v313, 0
    %v334 = vsel %vm329, %v314, 0
    %v337 = vsel %vm329, %v315, 0
    %v340 = vsel %vm329, %v316, 0
    %v343 = vsel %vm329, %v317, 0
    %v346 = vsel %vm329, %v318, 0
    %v349 = vsel %vm329, %v319, 0
    %v352 = vsel %vm329, %v320, 0
    %v355 = vsel %vm329, %v321, 0
    %357 = vmatpush.bf16.xpose.msra.mxu0 %v355
    %358 = vmatpush.bf16.xpose.msra.mxu0 %v352
    %359 = vmatpush.bf16.xpose.msra.mxu0 %v349
    %360 = vmatpush.bf16.xpose.msra.mxu0 %v346
    %361 = vmatpush.bf16.xpose.msra.mxu0 %v343
    %362 = vmatpush.bf16.xpose.msra.mxu0 %v340
    %363 = vmatpush.bf16.xpose.msra.mxu0 %v337
    %364 = vmatpush.bf16.xpose.msra.mxu0 %v334
    %365 = vmatmul.bf16.gmra.mxu0 %v331
    %v366 = vpop.f32.mrf.mxu0
    %v367 = vadd.f32 %v328, %v366
    %v368 = vpop.f32.mrf.mxu0
    %369 = vdwg.mxu0
    %370 = vst [vmem:[#allocation3] sm:$0x1] %v367
    // Predicated region
    $region30: #{tpu_custom_call.1} parent=1 // pred_check
      _
    $region31: #{tpu_custom_call.1} parent=1 // pred_check_branch
      %372 = sbr.rel (0) target = $region33
    $region32: #{tpu_custom_call.1} parent=1 // pred_region
      %374 = vsyncadd [#allocation4], 0
      %s376 = sshll.u32 [#allocation3], 4
      %s377 = int_to_ptr.vmem [resolvable:$true] %s376
      %s378 = sshll.u32 %s7, 4
      %s379 = int_to_ptr.hbm [resolvable:$true] %s378
      %381 = dma.vmem_to_hbm [thread:$0]  %s377, 16, %s379, [#allocation4]
    $region33: #{tpu_custom_call.1} parent=1 // pred_fallthru
      _
    // Predicated region
    $region34: #{tpu_custom_call.1} parent=1 // pred_check
      _
    $region35: #{tpu_custom_call.1} parent=1 // pred_check_branch
      %383 = sbr.rel (0) target = $region37
    $region36: #{tpu_custom_call.1} parent=1 // pred_region
      %385 = dma.done [#allocation4], 16
    $region37: #{tpu_custom_call.1} parent=1 // pred_fallthru
      _
    %386 = vsyncpa [#allocation4], 1

</llo_original>
